<compile_context>
chip_gen: v7x
topology: tpu7x:2x2x1
jax: 0.10.0
libtpu: 0.0.40
codegen_flags: <defaults>
</compile_context>

<pallas_src>
import functools
import math

import jax
import jax.numpy as jnp
from jax import lax
from jax.experimental import pallas as pl
from jax.experimental.pallas import tpu as pltpu


def _gnnrec_fused_kernel(adj_ref, xc_ref, b_ref, idx_ref, w_ref, out_ref,
                         emb_acc, *, num_pos, t_pad):
    i = pl.program_id(0)                      # row-block index of A
    k = pl.program_id(1)                      # reduction (column) block index of A
    tm = adj_ref.shape[0]
    rows = pl.ds(pl.multiple_of(i * tm, tm), tm)

    @pl.when(k == 0)
    def _():
        emb_acc[rows, :] = jnp.zeros((tm, emb_acc.shape[1]), jnp.float32)

    # bf16 x bf16 -> f32 accumulation of this (tm, tk) adjacency tile.
    emb_acc[rows, :] += jnp.dot(adj_ref[...], xc_ref[...],
                                preferred_element_type=jnp.float32)

    # Epilogue once the full A @ Xc is resident in the VMEM scratch.
    @pl.when((i == pl.num_programs(0) - 1) & (k == pl.num_programs(1) - 1))
    def _():
        emb = jnp.maximum(emb_acc[...] + b_ref[...], 0.0)             # [Np, Hp] f32
        # Fused src+dst gather: one [2*Tp, Np] bf16 one-hot @ emb on the MXU.
        # TODO(synk): at production T*N, chunk the one-hot over Tp tiles (or use a
        # scalar-prefetch pl.Element row gather in a second call) instead of one
        # big [2T, N] one-hot.
        n = emb.shape[0]
        tt = idx_ref.shape[0]                                         # 2 * Tp
        col = lax.broadcasted_iota(jnp.int32, (tt, n), 1)
        onehot = (idx_ref[...] == col).astype(jnp.bfloat16)
        gathered = jnp.dot(onehot, emb.astype(jnp.bfloat16),
                           preferred_element_type=jnp.float32)        # [2*Tp, Hp]
        src_emb = gathered[:t_pad, :]
        dst_emb = gathered[t_pad:, :]
        score = jnp.sum(src_emb * dst_emb, axis=-1, keepdims=True)    # [Tp, 1]
        row = lax.broadcasted_iota(jnp.int32, (t_pad, 1), 0)
        x = jnp.where(row < num_pos, score, -score)                   # pos: +s, neg: -s
        logsig = jnp.minimum(x, 0.0) - jnp.log1p(jnp.exp(-jnp.abs(x)))  # stable log(sigmoid)
        # w_ref already carries edge_weight * (1/E); padded rows carry weight 0, so
        #   sum == mean_e( w_e * ( -logsig(pos_e) - sum_k logsig(-neg_{e,k}) ) )
        out_ref[0, 0] = jnp.sum(w_ref[...] * (-logsig))


def _round_up(x, m):
    return ((x + m - 1) // m) * m


@functools.partial(jax.jit, static_argnames=("tile_m", "tile_k"))
def gnnrec_forward(features, w_enc, b_enc, adj_norm, w_g, b_g,
                   pos_src, pos_dst, neg_src, neg_dst, edge_weight,
                   *, tile_m=256, tile_k=512):
    # NOTE: out-of-range src/dst indices silently gather a zero embedding row
    # (no bounds check in the one-hot), unlike a PyTorch gather which errors.
    f32 = jnp.float32
    N, _ = features.shape
    H = w_g.shape[1]
    E = pos_src.shape[0]
    K = neg_src.shape[1]
    T = E * (K + 1)

    # Tile / padding geometry.  Lane dim of the adjacency block must be a
    # multiple of 128; the row block only needs sublane (8) alignment.
    # Gen-specific sizing: v5e keep 128-multiples, v6e prefers 256-multiples
    # (+ raise vmem_limit_bytes for fat tiles), v7x size against 64 MiB VMEM.
    tile_k = max(128, _round_up(tile_k, 128))
    tile_m = max(8, _round_up(tile_m, 8))
    blk = tile_m * tile_k // math.gcd(tile_m, tile_k)
    Np = _round_up(N, blk)
    Hp = _round_up(H, 128)                  # lane-dense hidden width
    Tp = _round_up(T, 8)

    # Fold the two linear layers (valid: row-normalized adjacency, no nonlinearity
    # between them) and hoist X @ W_comb out of the kernel:
    #   A @ (X W_enc + b_enc) @ W_g + b_g == A @ (X W_comb) + (b_enc W_g + b_g)
    w_comb = jnp.pad(w_enc.astype(f32) @ w_g.astype(f32), ((0, 0), (0, Hp - H)))      # [F, Hp]
    b_comb = jnp.pad(b_enc.astype(f32) @ w_g.astype(f32) + b_g.astype(f32),
                     (0, Hp - H)).reshape(1, Hp)                                       # [1, Hp]
    xc = jnp.pad(features.astype(f32) @ w_comb,
                 ((0, Np - N), (0, 0))).astype(jnp.bfloat16)                           # [Np, Hp]
    adj = jnp.pad(adj_norm.astype(f32),
                  ((0, Np - N), (0, Np - N))).astype(jnp.bfloat16)                     # [Np, Np]

    # Positive + flattened negative edges stacked into one src|dst index column;
    # negative row (e, k) inherits edge e's weight; fold in the 1/E of torch.mean.
    src_all = jnp.pad(jnp.concatenate([pos_src.reshape(-1),
                                       neg_src.reshape(-1)]).astype(jnp.int32), (0, Tp - T))
    dst_all = jnp.pad(jnp.concatenate([pos_dst.reshape(-1),
                                       neg_dst.reshape(-1)]).astype(jnp.int32), (0, Tp - T))
    idx = jnp.concatenate([src_all, dst_all]).reshape(2 * Tp, 1)                       # [2Tp, 1]
    w_all = jnp.pad(jnp.concatenate([edge_weight,
                                     jnp.repeat(edge_weight, K)]).astype(f32) / E,
                    (0, Tp - T)).reshape(Tp, 1)                                        # [Tp, 1]

    grid = (Np // tile_m, Np // tile_k)
    flops = 2 * Np * Np * Hp + 2 * (2 * Tp) * Np * Hp + 4 * Tp * Hp
    bytes_accessed = Np * Np * 2 + Np * Hp * 2 + Hp * 4 + 2 * Tp * 4 + Tp * 4 + 4

    loss = pl.pallas_call(
        functools.partial(_gnnrec_fused_kernel, num_pos=E, t_pad=Tp),
        out_shape=jax.ShapeDtypeStruct((1, 1), jnp.float32),
        grid=grid,
        in_specs=[
            pl.BlockSpec((tile_m, tile_k), lambda i, k: (i, k)),    # adjacency tile (streamed)
            pl.BlockSpec((tile_k, Hp), lambda i, k: (k, 0)),        # Xc tile
            pl.BlockSpec((1, Hp), lambda i, k: (0, 0)),             # folded bias
            pl.BlockSpec((2 * Tp, 1), lambda i, k: (0, 0)),         # src|dst indices
            pl.BlockSpec((Tp, 1), lambda i, k: (0, 0)),             # edge weights * (1/E)
        ],
        out_specs=pl.BlockSpec((1, 1), lambda i, k: (0, 0),
                               memory_space=pltpu.MemorySpace.SMEM),
        scratch_shapes=[pltpu.VMEM((Np, Hp), jnp.float32)],         # persistent emb accumulator
        compiler_params=pltpu.CompilerParams(
            dimension_semantics=("arbitrary", "arbitrary"),
            vmem_limit_bytes=32 * 1024 * 1024),
        cost_estimate=pl.CostEstimate(flops=flops, transcendentals=2 * Tp,
                                      bytes_accessed=bytes_accessed),
    )(adj, xc, b_comb, idx, w_all)
    return loss[0, 0]


if __name__ == "__main__":
    key = jax.random.PRNGKey(0)
    k_feat, k_wenc, k_benc, k_wg, k_bg, k_edge, k_neg, k_w = jax.random.split(key, 8)

    N = 16           # nodes
    F = 8            # input_size
    H = 32           # hidden_size
    E = 8            # positive edges
    K = 4            # neg_sample_size

    features = jax.random.normal(k_feat, (N, F), dtype=jnp.float32)

    # EncodeLayer params (nn.Linear(F, H)) — deterministic synthetic init.
    w_enc = jax.random.uniform(k_wenc, (F, H), jnp.float32, -1.0 / F ** 0.5, 1.0 / F ** 0.5)
    b_enc = jax.random.uniform(k_benc, (H,), jnp.float32, -1.0 / F ** 0.5, 1.0 / F ** 0.5)
    # gconv layer params (stand-in for the externally supplied gconv_model).
    w_g = jax.random.uniform(k_wg, (H, H), jnp.float32, -1.0 / H ** 0.5, 1.0 / H ** 0.5)
    b_g = jax.random.uniform(k_bg, (H,), jnp.float32, -1.0 / H ** 0.5, 1.0 / H ** 0.5)

    # Deterministic graph: E directed edges + self loops, row-normalized adjacency.
    # TODO(synk): DGL's edge_sampler (graph negative sampling) has no Pallas
    # equivalent; edge indices are built deterministically here instead.
    pos_src = jax.random.randint(k_edge, (E,), 0, N)
    pos_dst = (pos_src + 1 + jax.random.randint(k_neg, (E,), 0, N - 1)) % N
    adj = jnp.zeros((N, N), jnp.float32).at[pos_src, pos_dst].set(1.0)
    adj = adj + jnp.eye(N, dtype=jnp.float32)
    adj_norm = adj / jnp.sum(adj, axis=1, keepdims=True)

    # Deterministic negative sampling: K corrupted destinations per positive edge.
    neg_src = jnp.repeat(pos_src, K).reshape(E, K)
    neg_dst = jax.random.randint(jax.random.fold_in(k_neg, 1), (E, K), 0, N)

    edge_weight = jax.random.uniform(k_w, (E,), jnp.float32, 0.5, 1.5)  # pos_g.edata['weight']

    # Small tiles at toy scale (Np=128 -> grid (2, 1)); use 256/512-aligned tiles
    # at production N per the generation-specific sizing notes above.
    out = gnnrec_forward(features, w_enc, b_enc, adj_norm, w_g, b_g,
                         pos_src, pos_dst, neg_src, neg_dst, edge_weight,
                         tile_m=64, tile_k=128)
    jax.block_until_ready(out)

    # Pure-JAX f32 reference (unfolded chain) for a sanity check.
    emb_ref = jnp.maximum(adj_norm @ (features @ w_enc + b_enc) @ w_g + b_g, 0.0)
    pos_s = jnp.sum(emb_ref[pos_src] * emb_ref[pos_dst], axis=-1)
    neg_s = jnp.sum(emb_ref[neg_src] * emb_ref[neg_dst], axis=-1)
    _logsig = lambda x: jnp.minimum(x, 0.0) - jnp.log1p(jnp.exp(-jnp.abs(x)))
    loss_ref = jnp.mean((-_logsig(pos_s) - jnp.sum(_logsig(-neg_s), axis=-1)) * edge_weight)

    assert jnp.isfinite(out)
    assert jnp.allclose(out, loss_ref, rtol=1e-1, atol=1e-1), (out, loss_ref)
    print("KERNEL_OK")
</pallas_src>

<mosaic_0001>
module attributes {stable_mosaic.version = 11 : i64} {
  func.func @_gnnrec_fused_kernel(%arg0: i32, %arg1: i32, %arg2: memref<64x128xbf16, #tpu.memory_space<vmem>>, %arg3: memref<128x128xbf16, #tpu.memory_space<vmem>>, %arg4: memref<1x128xf32, #tpu.memory_space<vmem>>, %arg5: memref<80x1xi32, #tpu.memory_space<vmem>>, %arg6: memref<40x1xf32, #tpu.memory_space<vmem>>, %arg7: memref<1x1xf32, #tpu.memory_space<smem>>, %arg8: memref<128x128xf32, #tpu.memory_space<vmem>>) attributes {dimension_semantics = [#tpu.dimension_semantics<arbitrary>, #tpu.dimension_semantics<arbitrary>], iteration_bounds = array<i64: 2, 1>, scalar_prefetch = 0 : i64, scratch_operands = 1 : i64, tpu.core_type = #tpu.core_type<tc>, window_params = [{transform_indices = @transform_0, window_bounds = array<i64: 64, 128>}, {transform_indices = @transform_1, window_bounds = array<i64: 128, 128>}, {pipeline_mode = #tpu.pipeline_mode<synchronous>, transform_indices = @transform_2, window_bounds = array<i64: 1, 128>}, {pipeline_mode = #tpu.pipeline_mode<synchronous>, transform_indices = @transform_3, window_bounds = array<i64: 80, 1>}, {pipeline_mode = #tpu.pipeline_mode<synchronous>, transform_indices = @transform_4, window_bounds = array<i64: 40, 1>}, {transform_indices = @transform_5, window_bounds = array<i64: 1, 1>}]} {
    %c64_i32 = arith.constant 64 : i32
    %0 = arith.muli %arg0, %c64_i32 : i32
    %1 = tpu.assume_multiple %0, 64 : i32
    %c0_i32 = arith.constant 0 : i32
    %2 = arith.cmpi eq, %arg1, %c0_i32 : i32
    %3 = arith.extui %2 : i1 to i32
    %c0_i32_0 = arith.constant 0 : i32
    %4 = arith.cmpi ne, %3, %c0_i32_0 : i32
    scf.if %4 {
      %cst_8 = arith.constant 0.000000e+00 : f32
      %18 = vector.broadcast %cst_8 : f32 to vector<64x128xf32>
      %19 = arith.index_cast %1 : i32 to index
      %c0_9 = arith.constant 0 : index
      %20 = vector.load %arg8[%19, %c0_9] : memref<128x128xf32, #tpu.memory_space<vmem>>, vector<64x128xf32>
      tpu.vector_store %arg8[%19, %c0_9], %18 {strides = array<i32>} : memref<128x128xf32, #tpu.memory_space<vmem>>, vector<64x128xf32>,
    } else {
    }
    %5 = arith.index_cast %1 : i32 to index
    %c0 = arith.constant 0 : index
    %6 = vector.load %arg8[%5, %c0] : memref<128x128xf32, #tpu.memory_space<vmem>>, vector<64x128xf32>
    %c0_1 = arith.constant 0 : index
    %c0_2 = arith.constant 0 : index
    %7 = vector.load %arg2[%c0_1, %c0_2] : memref<64x128xbf16, #tpu.memory_space<vmem>>, vector<64x128xbf16>
    %c0_3 = arith.constant 0 : index
    %c0_4 = arith.constant 0 : index
    %8 = vector.load %arg3[%c0_3, %c0_4] : memref<128x128xbf16, #tpu.memory_space<vmem>>, vector<128x128xbf16>
    %cst = arith.constant dense<0.000000e+00> : vector<64x128xf32>
    %9 = tpu.matmul %7, %8, %cst {dimension_numbers = #tpu.dot_dimension_numbers<[1], [0], [0], [1], [0, 0, 1, 1], [], []>} : vector<64x128xbf16>, vector<128x128xbf16>, vector<64x128xf32> -> vector<64x128xf32>
    %10 = arith.addf %6, %9 : vector<64x128xf32>
    %11 = arith.index_cast %1 : i32 to index
    %c0_5 = arith.constant 0 : index
    %12 = vector.load %arg8[%11, %c0_5] : memref<128x128xf32, #tpu.memory_space<vmem>>, vector<64x128xf32>
    tpu.vector_store %arg8[%11, %c0_5], %10 {strides = array<i32>} : memref<128x128xf32, #tpu.memory_space<vmem>>, vector<64x128xf32>,
    %c1_i32 = arith.constant 1 : i32
    %13 = arith.cmpi eq, %arg0, %c1_i32 : i32
    %c0_i32_6 = arith.constant 0 : i32
    %14 = arith.cmpi eq, %arg1, %c0_i32_6 : i32
    %15 = arith.andi %13, %14 : i1
    %16 = arith.extui %15 : i1 to i32
    %c0_i32_7 = arith.constant 0 : i32
    %17 = arith.cmpi ne, %16, %c0_i32_7 : i32
    scf.if %17 {
      %c0_8 = arith.constant 0 : index
      %c0_9 = arith.constant 0 : index
      %18 = vector.load %arg8[%c0_8, %c0_9] : memref<128x128xf32, #tpu.memory_space<vmem>>, vector<128x128xf32>
      %c0_10 = arith.constant 0 : index
      %c0_11 = arith.constant 0 : index
      %19 = vector.load %arg4[%c0_10, %c0_11] : memref<1x128xf32, #tpu.memory_space<vmem>>, vector<1x128xf32>
      %20 = vector.broadcast %19 : vector<1x128xf32> to vector<128x128xf32>
      %21 = arith.addf %18, %20 : vector<128x128xf32>
      %cst_12 = arith.constant 0.000000e+00 : f32
      %22 = vector.broadcast %cst_12 : f32 to vector<128x128xf32>
      %23 = arith.maximumf %21, %22 : vector<128x128xf32>
      %24 = tpu.iota {dimensions = array<i32: 1>} : vector<80x128xi32>
      %c0_13 = arith.constant 0 : index
      %c0_14 = arith.constant 0 : index
      %25 = vector.load %arg5[%c0_13, %c0_14] : memref<80x1xi32, #tpu.memory_space<vmem>>, vector<80x1xi32>
      %26 = vector.broadcast %25 : vector<80x1xi32> to vector<80x128xi32>
      %27 = arith.cmpi eq, %26, %24 : vector<80x128xi32>
      %28 = arith.extui %27 : vector<80x128xi1> to vector<80x128xi32>
      %29 = arith.sitofp %28 : vector<80x128xi32> to vector<80x128xf32>
      %30 = arith.truncf %29 : vector<80x128xf32> to vector<80x128xbf16>
      %31 = arith.truncf %23 : vector<128x128xf32> to vector<128x128xbf16>
      %cst_15 = arith.constant dense<0.000000e+00> : vector<80x128xf32>
      %32 = tpu.matmul %30, %31, %cst_15 {dimension_numbers = #tpu.dot_dimension_numbers<[1], [0], [0], [1], [0, 0, 1, 1], [], []>} : vector<80x128xbf16>, vector<128x128xbf16>, vector<80x128xf32> -> vector<80x128xf32>
      %33 = vector.extract_strided_slice %32 {offsets = [0, 0], sizes = [40, 128], strides = [1, 1]} : vector<80x128xf32> to vector<40x128xf32>
      %34 = vector.extract_strided_slice %32 {offsets = [40, 0], sizes = [40, 128], strides = [1, 1]} : vector<80x128xf32> to vector<40x128xf32>
      %35 = arith.mulf %33, %34 : vector<40x128xf32>
      %cst_16 = arith.constant dense<0.000000e+00> : vector<40xf32>
      %36 = vector.multi_reduction <add>, %35, %cst_16 [1] : vector<40x128xf32> to vector<40xf32>
      %37 = vector.shape_cast %36 : vector<40xf32> to vector<40x1xf32>
      %38 = tpu.iota {dimensions = array<i32: 0>} : vector<40x1xi32>
      %c8_i32 = arith.constant 8 : i32
      %39 = vector.broadcast %c8_i32 : i32 to vector<40x1xi32>
      %40 = arith.cmpi slt, %38, %39 : vector<40x1xi32>
      %cst_17 = arith.constant 0.000000e+00 : f32
      %41 = vector.broadcast %cst_17 : f32 to vector<40x1xf32>
      %42 = arith.subf %41, %37 : vector<40x1xf32>
      %43 = arith.select %40, %37, %42 : vector<40x1xi1>, vector<40x1xf32>
      %cst_18 = arith.constant 0.000000e+00 : f32
      %44 = vector.broadcast %cst_18 : f32 to vector<40x1xf32>
      %45 = arith.minimumf %43, %44 : vector<40x1xf32>
      %46 = math.absf %43 : vector<40x1xf32>
      %cst_19 = arith.constant 0.000000e+00 : f32
      %47 = vector.broadcast %cst_19 : f32 to vector<40x1xf32>
      %48 = arith.subf %47, %46 : vector<40x1xf32>
      %49 = math.exp %48 : vector<40x1xf32>
      %50 = math.log1p %49 : vector<40x1xf32>
      %51 = arith.subf %45, %50 : vector<40x1xf32>
      %c0_20 = arith.constant 0 : index
      %c0_21 = arith.constant 0 : index
      %52 = vector.load %arg6[%c0_20, %c0_21] : memref<40x1xf32, #tpu.memory_space<vmem>>, vector<40x1xf32>
      %cst_22 = arith.constant 0.000000e+00 : f32
      %53 = vector.broadcast %cst_22 : f32 to vector<40x1xf32>
      %54 = arith.subf %53, %51 : vector<40x1xf32>
      %55 = arith.mulf %52, %54 : vector<40x1xf32>
      %56 = vector.shape_cast %55 : vector<40x1xf32> to vector<1x40x1xf32>
      %cst_23 = arith.constant dense<0.000000e+00> : vector<1xf32>
      %57 = vector.multi_reduction <add>, %56, %cst_23 [1, 2] : vector<1x40x1xf32> to vector<1xf32>
      %58 = vector.shape_cast %57 : vector<1xf32> to vector<1x1x1xf32>
      %59 = vector.extract %58[0, 0, 0] : f32 from vector<1x1x1xf32>
      %c0_24 = arith.constant 0 : index
      %c0_25 = arith.constant 0 : index
      %60 = memref.load %arg7[%c0_24, %c0_25] : memref<1x1xf32, #tpu.memory_space<smem>>
      memref.store %59, %arg7[%c0_24, %c0_25] : memref<1x1xf32, #tpu.memory_space<smem>>
    } else {
    }
    return
  }
  func.func @transform_0(%arg0: i32, %arg1: i32) -> (i32, i32) {
    %c0_i32 = arith.constant 0 : i32
    return %arg0, %arg1 : i32, i32
  }
  func.func @transform_1(%arg0: i32, %arg1: i32) -> (i32, i32) {
    %c0_i32 = arith.constant 0 : i32
    %c0_i32_0 = arith.constant 0 : i32
    return %arg1, %c0_i32 : i32, i32
  }
  func.func @transform_2(%arg0: i32, %arg1: i32) -> (i32, i32) {
    %c0_i32 = arith.constant 0 : i32
    %c0_i32_0 = arith.constant 0 : i32
    %c0_i32_1 = arith.constant 0 : i32
    return %c0_i32, %c0_i32_0 : i32, i32
  }
  func.func @transform_3(%arg0: i32, %arg1: i32) -> (i32, i32) {
    %c0_i32 = arith.constant 0 : i32
    %c0_i32_0 = arith.constant 0 : i32
    %c0_i32_1 = arith.constant 0 : i32
    return %c0_i32, %c0_i32_0 : i32, i32
  }
  func.func @transform_4(%arg0: i32, %arg1: i32) -> (i32, i32) {
    %c0_i32 = arith.constant 0 : i32
    %c0_i32_0 = arith.constant 0 : i32
    %c0_i32_1 = arith.constant 0 : i32
    return %c0_i32, %c0_i32_0 : i32, i32
  }
  func.func @transform_5(%arg0: i32, %arg1: i32) -> (i32, i32) {
    %c0_i32 = arith.constant 0 : i32
    %c0_i32_0 = arith.constant 0 : i32
    %c0_i32_1 = arith.constant 0 : i32
    return %c0_i32, %c0_i32_0 : i32, i32
  }
}

</mosaic_0001>

<llo_original>
// kernel: gnnrec_forward.1
$region0: #{gnnrec_forward.1}
  #allocation0 [shape = 'u32[]', space=smem, size = 0x4, offset = 0x4, fixed_abs, tag = 'smem constant byte address 0x4 - core index']
  #allocation1 [shape = 'u32[144,128]{1,0:T(1,128)}', space=vmem, size = 0x12000, scoped, tag = 'internal scratch']
  #allocation2 [shape = 'f32[128,128]{1,0:T(8,128)}', space=vmem, size = 0x10000, scoped, tag = 'scratch operand']
  %s0 = inlined_call_operand.vmem [shape: bf16[128,128], index: 0, kind: input, shape index: {}]
  %s1 = inlined_call_operand.vmem [shape: bf16[128,128], index: 1, kind: input, shape index: {}]
  %s2 = inlined_call_operand.vmem [shape: f32[1,128], index: 2, kind: input, shape index: {}]
  %s3 = inlined_call_operand.vmem [shape: s32[80,1], index: 3, kind: input, shape index: {}]
  %s4 = inlined_call_operand.vmem [shape: f32[40,1], index: 4, kind: input, shape index: {}]
  %s5 = inlined_call_operand.hbm [shape: f32[1,1], index: 5, kind: output, shape index: {}]
  %s6 = sld [smem:[#allocation0]]
  $region61: #{gnnrec_forward.1} parent=0
    _
  %s8 = ssub.s32 1, %s6
  %s9 = scalar_select 0, %s8, %s6
  $region1: #{gnnrec_forward.1} parent=0
    #allocation3 [shape = 'u8[512]{0}', space=smem, size = 0x200, scoped, tag = 'output window, operand 0, single buffered']
    #allocation4 [shape = 's32[2]{0}', space=sflag, size = 0x8, scoped, tag = 'scoped memory for gnnrec_forward.1']
    %10 = vsyncpa [#allocation4], 0
    loop: start=0, step=1, limit=4
    $region2: #{gnnrec_forward.1} parent=1 // loop_pre_header
      _
    $region3: #{gnnrec_forward.1} parent=1 // loop_header
      %s12 = sphi 0, %s16
      %p13 = scmp.ge.s32.totalorder %s12, 4
      %s19 = sphi 0, %s31
      %s20 = sphi 0, %s27
      %s21 = sphi 0, %s19
      %s22 = sphi 0, %s20
      %s23 = sphi 0, %s21
      %s24 = sphi 0, %s22
      %s36 = sphi 0, %s38
      %s39 = sphi 0, %s36
      %s40 = sphi 0, %s39
      %s56 = sphi 0, %s40
      %s62 = sphi 0, %s64
      %s65 = sphi 0, %s62
      %s66 = sphi 0, %s65
      %s82 = sphi 0, %s66
      %s86 = sphi 0, %s86
      %s88 = sphi 0, %s86
      %s89 = sphi 0, %s88
      %s103 = sphi 0, %s89
      %s107 = sphi 0, %s107
      %s109 = sphi 0, %s107
      %s110 = sphi 0, %s109
      %s124 = sphi 0, %s110
      %s128 = sphi 0, %s128
      %s130 = sphi 0, %s128
      %s131 = sphi 0, %s130
      %s145 = sphi 0, %s131
      %s149 = sphi 0, %s149
      %s151 = sphi 0, %s149
      %s152 = sphi 0, %s151
      %s166 = sphi 0, %s152
    $region4: #{gnnrec_forward.1} parent=1 // loop_header_branch
      %15 = sbr.rel (%p13) target = $region8
    $region5: #{gnnrec_forward.1} parent=1 // loop_body
      %s17 = ssub.s32 %s12, 1
      %s18 = ssub.s32 %s12, 2
      %s25 = sadd.s32 1, %s20
      %p26 = scmp.ge.s32.totalorder %s25, 1
      %s27 = scalar_select %p26, 0, %s25
      %s28 = sadd.s32 1, %s19
      %s29 = scalar_select %p26, %s28, %s19
      %p30 = scmp.ge.s32.totalorder %s29, 2
      %s31 = scalar_select %p30, 0, %s29
      %s32 = ssub.s32 %s19, %s31
      %s33 = ssub.s32 %s20, %s27
      %s34 = sor.u32 %s32, %s33
      %p35 = scmp.eq.s32.totalorder %s34, 0
      %s37 = sadd.s32 %s36, 1
      %s38 = scalar_select %p35, %s36, %s37
      %p41 = pneg %p35
      %p42 = scmp.eq.s32.totalorder %s12, 1
      %p43 = por %p41, %p42
      %p44 = scmp.ne.s32.totalorder %s36, %s39
      %p45 = scmp.eq.s32.totalorder %s12, 0
      %p46 = por %p44, %p45
      %p47 = scmp.ne.s32.totalorder %s36, %s39
      %p48 = scmp.eq.s32.totalorder %s17, 1
      %p49 = por %p47, %p48
      %p50 = scmp.ne.s32.totalorder %s39, %s40
      %p51 = scmp.eq.s32.totalorder %s17, 0
      %p52 = por %p50, %p51
      %p53 = scmp.ne.s32.totalorder %s39, %s40
      %p54 = scmp.eq.s32.totalorder %s18, 1
      %p55 = por %p53, %p54
      %p57 = scmp.ne.s32.totalorder %s40, %s56
      %p58 = scmp.eq.s32.totalorder %s18, 0
      %p59 = por %p57, %p58
      %s60 = ssub.s32 %s20, %s27
      %p61 = scmp.eq.s32.totalorder %s60, 0
      %s63 = sadd.s32 %s62, 1
      %s64 = scalar_select %p61, %s62, %s63
      %p67 = pneg %p61
      %p68 = scmp.eq.s32.totalorder %s12, 1
      %p69 = por %p67, %p68
      %p70 = scmp.ne.s32.totalorder %s62, %s65
      %p71 = scmp.eq.s32.totalorder %s12, 0
      %p72 = por %p70, %p71
      %p73 = scmp.ne.s32.totalorder %s62, %s65
      %p74 = scmp.eq.s32.totalorder %s17, 1
      %p75 = por %p73, %p74
      %p76 = scmp.ne.s32.totalorder %s65, %s66
      %p77 = scmp.eq.s32.totalorder %s17, 0
      %p78 = por %p76, %p77
      %p79 = scmp.ne.s32.totalorder %s65, %s66
      %p80 = scmp.eq.s32.totalorder %s18, 1
      %p81 = por %p79, %p80
      %p83 = scmp.ne.s32.totalorder %s66, %s82
      %p84 = scmp.eq.s32.totalorder %s18, 0
      %p85 = por %p83, %p84
      %s87 = sadd.s32 %s86, 1
      %p90 = scmp.eq.s32.totalorder %s12, 1
      %p91 = scmp.ne.s32.totalorder %s86, %s88
      %p92 = scmp.eq.s32.totalorder %s12, 0
      %p93 = por %p91, %p92
      %p94 = scmp.ne.s32.totalorder %s86, %s88
      %p95 = scmp.eq.s32.totalorder %s17, 1
      %p96 = por %p94, %p95
      %p97 = scmp.ne.s32.totalorder %s88, %s89
      %p98 = scmp.eq.s32.totalorder %s17, 0
      %p99 = por %p97, %p98
      %p100 = scmp.ne.s32.totalorder %s88, %s89
      %p101 = scmp.eq.s32.totalorder %s18, 1
      %p102 = por %p100, %p101
      %p104 = scmp.ne.s32.totalorder %s89, %s103
      %p105 = scmp.eq.s32.totalorder %s18, 0
      %p106 = por %p104, %p105
      %s108 = sadd.s32 %s107, 1
      %p111 = scmp.eq.s32.totalorder %s12, 1
      %p112 = scmp.ne.s32.totalorder %s107, %s109
      %p113 = scmp.eq.s32.totalorder %s12, 0
      %p114 = por %p112, %p113
      %p115 = scmp.ne.s32.totalorder %s107, %s109
      %p116 = scmp.eq.s32.totalorder %s17, 1
      %p117 = por %p115, %p116
      %p118 = scmp.ne.s32.totalorder %s109, %s110
      %p119 = scmp.eq.s32.totalorder %s17, 0
      %p120 = por %p118, %p119
      %p121 = scmp.ne.s32.totalorder %s109, %s110
      %p122 = scmp.eq.s32.totalorder %s18, 1
      %p123 = por %p121, %p122
      %p125 = scmp.ne.s32.totalorder %s110, %s124
      %p126 = scmp.eq.s32.totalorder %s18, 0
      %p127 = por %p125, %p126
      %s129 = sadd.s32 %s128, 1
      %p132 = scmp.eq.s32.totalorder %s12, 1
      %p133 = scmp.ne.s32.totalorder %s128, %s130
      %p134 = scmp.eq.s32.totalorder %s12, 0
      %p135 = por %p133, %p134
      %p136 = scmp.ne.s32.totalorder %s128, %s130
      %p137 = scmp.eq.s32.totalorder %s17, 1
      %p138 = por %p136, %p137
      %p139 = scmp.ne.s32.totalorder %s130, %s131
      %p140 = scmp.eq.s32.totalorder %s17, 0
      %p141 = por %p139, %p140
      %p142 = scmp.ne.s32.totalorder %s130, %s131
      %p143 = scmp.eq.s32.totalorder %s18, 1
      %p144 = por %p142, %p143
      %p146 = scmp.ne.s32.totalorder %s131, %s145
      %p147 = scmp.eq.s32.totalorder %s18, 0
      %p148 = por %p146, %p147
      %s150 = sadd.s32 %s149, 1
      %p153 = scmp.eq.s32.totalorder %s12, 1
      %p154 = scmp.ne.s32.totalorder %s149, %s151
      %p155 = scmp.eq.s32.totalorder %s12, 0
      %p156 = por %p154, %p155
      %p157 = scmp.ne.s32.totalorder %s149, %s151
      %p158 = scmp.eq.s32.totalorder %s17, 1
      %p159 = por %p157, %p158
      %p160 = scmp.ne.s32.totalorder %s151, %s152
      %p161 = scmp.eq.s32.totalorder %s17, 0
      %p162 = por %p160, %p161
      %p163 = scmp.ne.s32.totalorder %s151, %s152
      %p164 = scmp.eq.s32.totalorder %s18, 1
      %p165 = por %p163, %p164
      %p167 = scmp.ne.s32.totalorder %s152, %s166
      %p168 = scmp.eq.s32.totalorder %s18, 0
      %p169 = por %p167, %p168
      %p170 = scmp.le.s32.totalorder 1, %s12
      %p171 = scmp.lt.s32.totalorder %s12, 3
      %p172 = pnand %p170, %p171
      %p173 = pneg %p172
      // Predicated region
      $region9: #{gnnrec_forward.1} parent=5 // pred_check
        _
      $region10: #{gnnrec_forward.1} parent=5 // pred_check_branch
        %175 = sbr.rel (%p172) target = $region12
      $region11: #{gnnrec_forward.1} parent=5 // pred_region
        %s176 = ssub.s32 %s12, 1
        // Predicated region
        $region13: #{gnnrec_forward.1} parent=11 // pred_check
          %p177 = pneg %p78
        $region14: #{gnnrec_forward.1} parent=11 // pred_check_branch
          %179 = sbr.rel (%p177) target = $region16
        $region15: #{gnnrec_forward.1} parent=11 // pred_region
          %s180 = smul.u32 16, %s22
          %p181 = scmp.lt.s32.totalorder %s180, 15
          %s182 = scalar_select %p181, %s180, 15
          %s183 = smul.addr %s182, 4
          %s184 = scalar_lea.vmem %s1, %s183
          %s185 = smul.u32 16, %s22
        $region16: #{gnnrec_forward.1} parent=11 // pred_fallthru
          _
        // Predicated region
        $region17: #{gnnrec_forward.1} parent=11 // pred_check
          %p186 = pneg %p99
        $region18: #{gnnrec_forward.1} parent=11 // pred_check_branch
          %188 = sbr.rel (%p186) target = $region20
        $region19: #{gnnrec_forward.1} parent=11 // pred_region
          _
        $region20: #{gnnrec_forward.1} parent=11 // pred_fallthru
          _
        // Predicated region
        $region21: #{gnnrec_forward.1} parent=11 // pred_check
          %p189 = pneg %p120
        $region22: #{gnnrec_forward.1} parent=11 // pred_check_branch
          %191 = sbr.rel (%p189) target = $region24
        $region23: #{gnnrec_forward.1} parent=11 // pred_region
          _
        $region24: #{gnnrec_forward.1} parent=11 // pred_fallthru
          _
        // Predicated region
        $region25: #{gnnrec_forward.1} parent=11 // pred_check
          %p192 = pneg %p141
        $region26: #{gnnrec_forward.1} parent=11 // pred_check_branch
          %194 = sbr.rel (%p192) target = $region28
        $region27: #{gnnrec_forward.1} parent=11 // pred_region
          _
        $region28: #{gnnrec_forward.1} parent=11 // pred_fallthru
          _
      $region12: #{gnnrec_forward.1} parent=5 // pred_fallthru
        _
      %p195 = scmp.lt.s32.totalorder %s12, 2
      // Predicated region
      $region29: #{gnnrec_forward.1} parent=5 // pred_check
        %p196 = pneg %p195
      $region30: #{gnnrec_forward.1} parent=5 // pred_check_branch
        %198 = sbr.rel (%p196) target = $region32
      $region31: #{gnnrec_forward.1} parent=5 // pred_region
        // Predicated region
        $region33: #{gnnrec_forward.1} parent=31 // pred_check
          %p199 = pneg %p46
        $region34: #{gnnrec_forward.1} parent=31 // pred_check_branch
          %201 = sbr.rel (%p199) target = $region36
        $region35: #{gnnrec_forward.1} parent=31 // pred_region
          %s202 = smul.u32 8, %s19
          %p203 = scmp.lt.s32.totalorder %s202, 15
          %s204 = scalar_select %p203, %s202, 15
          %p205 = scmp.lt.s32.totalorder %s20, 0
          %s206 = scalar_select %p205, %s20, 0
          %s207 = sadd.s32 %s206, %s204
          %s208 = smul.addr %s207, 4
          %s209 = scalar_lea.vmem %s0, %s208
          %s210 = smul.u32 8, %s19
        $region36: #{gnnrec_forward.1} parent=31 // pred_fallthru
          _
      $region32: #{gnnrec_forward.1} parent=5 // pred_fallthru
        _
      %p211 = scmp.le.s32.totalorder 1, %s12
      %p212 = scmp.lt.s32.totalorder %s12, 3
      %p213 = pnand %p211, %p212
      %p214 = pneg %p213
      // Predicated region
      $region37: #{gnnrec_forward.1} parent=5 // pred_check
        _
      $region38: #{gnnrec_forward.1} parent=5 // pred_check_branch
        %216 = sbr.rel (%p213) target = $region40
      $region39: #{gnnrec_forward.1} parent=5 // pred_region
        %s217 = ssub.s32 %s12, 1
        %s218 = smul.u32 8, %s21
        %p219 = scmp.lt.s32.totalorder %s218, 15
        %s220 = scalar_select %p219, %s218, 15
        %p221 = scmp.lt.s32.totalorder %s22, 0
        %s222 = scalar_select %p221, %s22, 0
        %s223 = sadd.s32 %s222, %s220
        %s224 = smul.addr %s223, 4
        %s225 = scalar_lea.vmem %s0, %s224
        %p226 = pneg %p52
        %p227 = pneg %p49
        %s228 = smul.u32 16, %s22
        %p229 = scmp.lt.s32.totalorder %s228, 15
        %s230 = scalar_select %p229, %s228, 15
        %s231 = smul.addr %s230, 4
        %s232 = scalar_lea.vmem %s1, %s231
        %p233 = pneg %p78
        %p234 = pneg %p75
        %p235 = pneg %p99
        %p236 = pneg %p96
        %p237 = pneg %p120
        %p238 = pneg %p117
        %p239 = pneg %p141
        %p240 = pneg %p138
        %p241 = pneg %p162
        %p242 = pneg %p159
        %s243 = smul.u32 8, %s21
        %p244 = scmp.lt.s32.totalorder %s243, 15
        %s245 = scalar_select %p244, %s243, 15
        %p246 = scmp.lt.s32.totalorder %s22, 0
        %s247 = scalar_select %p246, %s22, 0
        %s248 = sadd.s32 %s247, %s245
        %s249 = smul.addr %s248, 4
        %s250 = scalar_lea.vmem %s0, %s249
        %s251 = smul.u32 8, %s21
        %s252 = smul.u32 16, %s22
        %p253 = scmp.lt.s32.totalorder %s252, 15
        %s254 = scalar_select %p253, %s252, 15
        %s255 = smul.addr %s254, 4
        %s256 = scalar_lea.vmem %s1, %s255
        %s257 = smul.u32 16, %s22
        %s259 = smul.u32 %s21, 64
        %p260 = scmp.eq.s32.totalorder %s22, 0
        // Predicated region
        $region41: #{gnnrec_forward.1} parent=39 // pred_check
          %p261 = pneg %p260
        $region42: #{gnnrec_forward.1} parent=39 // pred_check_branch
          %263 = sbr.rel (%p261) target = $region44
        $region43: #{gnnrec_forward.1} parent=39 // pred_region
          %s264 = scalar_lea.vmem [#allocation2], %s259
          %265 = vst [vmem:[%s264] sm:$0xff] 0.0
          %266 = vst [vmem:[%s264 + $0x8] sm:$0xff] 0.0
          %267 = vst [vmem:[%s264 + $0x10] sm:$0xff] 0.0
          %268 = vst [vmem:[%s264 + $0x18] sm:$0xff] 0.0
          %269 = vst [vmem:[%s264 + $0x20] sm:$0xff] 0.0
          %270 = vst [vmem:[%s264 + $0x28] sm:$0xff] 0.0
          %271 = vst [vmem:[%s264 + $0x30] sm:$0xff] 0.0
          %272 = vst [vmem:[%s264 + $0x38] sm:$0xff] 0.0
        $region44: #{gnnrec_forward.1} parent=39 // pred_fallthru
          _
        %s273 = scalar_lea.vmem [#allocation2], %s259
        %v274 = vld [vmem:[%s273] sm:$0xff]
        %v275 = vld [vmem:[%s273 + $0x8] sm:$0xff]
        %v276 = vld [vmem:[%s273 + $0x10] sm:$0xff]
        %v277 = vld [vmem:[%s273 + $0x18] sm:$0xff]
        %v278 = vld [vmem:[%s273 + $0x20] sm:$0xff]
        %v279 = vld [vmem:[%s273 + $0x28] sm:$0xff]
        %v280 = vld [vmem:[%s273 + $0x30] sm:$0xff]
        %v281 = vld [vmem:[%s273 + $0x38] sm:$0xff]
        %v282 = vld [vmem:[%s250] sm:$0xf]
        %v283 = vld [vmem:[%s250 + $0x4] sm:$0xf]
        %v284 = vld [vmem:[%s250 + $0x8] sm:$0xf]
        %v285 = vld [vmem:[%s250 + $0xc] sm:$0xf]
        %v286 = vld [vmem:[%s250 + $0x10] sm:$0xf]
        %v287 = vld [vmem:[%s250 + $0x14] sm:$0xf]
        %v288 = vld [vmem:[%s250 + $0x18] sm:$0xf]
        %v289 = vld [vmem:[%s250 + $0x1c] sm:$0xf]
        %v290 = vld [vmem:[%s256] sm:$0xf]
        %v291 = vld [vmem:[%s256 + $0x4] sm:$0xf]
        %v292 = vld [vmem:[%s256 + $0x8] sm:$0xf]
        %v293 = vld [vmem:[%s256 + $0xc] sm:$0xf]
        %v294 = vld [vmem:[%s256 + $0x10] sm:$0xf]
        %v295 = vld [vmem:[%s256 + $0x14] sm:$0xf]
        %v296 = vld [vmem:[%s256 + $0x18] sm:$0xf]
        %v297 = vld [vmem:[%s256 + $0x1c] sm:$0xf]
        %v298 = vld [vmem:[%s256 + $0x20] sm:$0xf]
        %v299 = vld [vmem:[%s256 + $0x24] sm:$0xf]
        %v300 = vld [vmem:[%s256 + $0x28] sm:$0xf]
        %v301 = vld [vmem:[%s256 + $0x2c] sm:$0xf]
        %v302 = vld [vmem:[%s256 + $0x30] sm:$0xf]
        %v303 = vld [vmem:[%s256 + $0x34] sm:$0xf]
        %v304 = vld [vmem:[%s256 + $0x38] sm:$0xf]
        %v305 = vld [vmem:[%s256 + $0x3c] sm:$0xf]
        %v314 = vunpack.c.l.b16 %v282
        %v315 = vunpack.c.l.b16 %v283
        %v316 = vunpack.c.l.b16 %v284
        %v317 = vunpack.c.l.b16 %v285
        %v318 = vunpack.c.l.b16 %v286
        %v319 = vunpack.c.l.b16 %v287
        %v320 = vunpack.c.l.b16 %v288
        %v321 = vunpack.c.l.b16 %v289
        %v322 = vpack.c.b16 %v315, %v314
        %v323 = vpack.c.b16 %v317, %v316
        %v324 = vpack.c.b16 %v319, %v318
        %v325 = vpack.c.b16 %v321, %v320
        %v346 = vunpack.c.l.b16 %v290
        %v347 = vunpack.c.l.b16 %v291
        %v348 = vunpack.c.l.b16 %v292
        %v349 = vunpack.c.l.b16 %v293
        %v350 = vunpack.c.l.b16 %v294
        %v351 = vunpack.c.l.b16 %v295
        %v352 = vunpack.c.l.b16 %v296
        %v353 = vunpack.c.l.b16 %v297
        %v354 = vunpack.c.l.b16 %v298
        %v355 = vunpack.c.l.b16 %v299
        %v356 = vunpack.c.l.b16 %v300
        %v357 = vunpack.c.l.b16 %v301
        %v358 = vunpack.c.l.b16 %v302
        %v359 = vunpack.c.l.b16 %v303
        %v360 = vunpack.c.l.b16 %v304
        %v361 = vunpack.c.l.b16 %v305
        %v362 = vpack.c.b16 %v347, %v346
        %v363 = vpack.c.b16 %v349, %v348
        %v364 = vpack.c.b16 %v351, %v350
        %v365 = vpack.c.b16 %v353, %v352
        %v366 = vpack.c.b16 %v355, %v354
        %v367 = vpack.c.b16 %v357, %v356
        %v368 = vpack.c.b16 %v359, %v358
        %v369 = vpack.c.b16 %v361, %v360
        %378 = vmatprep.subr.bf16.mxu0 0
        %379 = vmatpush1.bf16.msra.mxu0 %v362
        %380 = vmatprep.subr.bf16.mxu0 0
        %381 = vmatpush1.bf16.msra.mxu0 %v363
        %382 = vmatprep.subr.bf16.mxu0 0
        %383 = vmatpush1.bf16.msra.mxu0 %v364
        %384 = vmatprep.subr.bf16.mxu0 0
        %385 = vmatpush1.bf16.msra.mxu0 %v365
        %386 = vmatprep.subr.bf16.mxu0 0
        %387 = vmatpush1.bf16.msra.mxu0 %v366
        %388 = vmatprep.subr.bf16.mxu0 0
        %389 = vmatpush1.bf16.msra.mxu0 %v367
        %390 = vmatprep.subr.bf16.mxu0 0
        %391 = vmatpush1.bf16.msra.mxu0 %v368
        %392 = vmatprep.subr.bf16.mxu0 0
        %393 = vmatpush1.bf16.msra.mxu0 %v369
        %394 = vmatprep.subr.bf16.mxu0 0
        %395 = vmatpush1.bf16.msra.mxu0 0
        %396 = vmatprep.subr.bf16.mxu0 0
        %397 = vmatpush1.bf16.msra.mxu0 0
        %398 = vmatprep.subr.bf16.mxu0 0
        %399 = vmatpush1.bf16.msra.mxu0 0
        %400 = vmatprep.subr.bf16.mxu0 0
        %401 = vmatpush1.bf16.msra.mxu0 0
        %402 = vmatprep.subr.bf16.mxu0 0
        %403 = vmatpush1.bf16.msra.mxu0 0
        %404 = vmatprep.subr.bf16.mxu0 0
        %405 = vmatpush1.bf16.msra.mxu0 0
        %406 = vmatprep.subr.bf16.mxu0 0
        %407 = vmatpush1.bf16.msra.mxu0 0
        %408 = vmatprep.subr.bf16.mxu0 0
        %409 = vmatpush1.bf16.msra.mxu0 0
        %410 = vmatprep.mubr.bf16.mxu0 0
        %411 = vmatmul.mubr.bf16.gmra.mrb[0].mxu0 %v322
        %v412 = vpop.f32.mrb[0].mxu0
        %v413 = vadd.f32 0.0, %v412
        %v414 = vpop.f32.mrb[0].mxu0
        %v415 = vpop.f32.mrb[0].mxu0
        %v416 = vadd.f32 0.0, %v415
        %v417 = vpop.f32.mrb[0].mxu0
        %418 = vmatprep.mubr.bf16.mxu0 0
        %419 = vmatmul.mubr.bf16.gmra.mrb[0].mxu0 %v323
        %v420 = vpop.f32.mrb[0].mxu0
        %v421 = vadd.f32 0.0, %v420
        %v422 = vpop.f32.mrb[0].mxu0
        %v423 = vpop.f32.mrb[0].mxu0
        %v424 = vadd.f32 0.0, %v423
        %v425 = vpop.f32.mrb[0].mxu0
        %426 = vmatprep.mubr.bf16.mxu0 0
        %427 = vmatmul.mubr.bf16.gmra.mrb[0].mxu0 %v324
        %v428 = vpop.f32.mrb[0].mxu0
        %v429 = vadd.f32 0.0, %v428
        %v430 = vpop.f32.mrb[0].mxu0
        %v431 = vpop.f32.mrb[0].mxu0
        %v432 = vadd.f32 0.0, %v431
        %v433 = vpop.f32.mrb[0].mxu0
        %434 = vmatprep.mubr.bf16.mxu0 0
        %435 = vmatmul.mubr.bf16.gmra.mrb[0].mxu0 %v325
        %v436 = vpop.f32.mrb[0].mxu0
        %v437 = vadd.f32 0.0, %v436
        %v438 = vpop.f32.mrb[0].mxu0
        %v439 = vpop.f32.mrb[0].mxu0
        %v440 = vadd.f32 0.0, %v439
        %v441 = vpop.f32.mrb[0].mxu0
        %442 = vdwg.mxu0
        %v443 = vadd.f32 %v274, %v413
        %v444 = vadd.f32 %v275, %v416
        %v445 = vadd.f32 %v276, %v421
        %v446 = vadd.f32 %v277, %v424
        %v447 = vadd.f32 %v278, %v429
        %v448 = vadd.f32 %v279, %v432
        %v449 = vadd.f32 %v280, %v437
        %v450 = vadd.f32 %v281, %v440
        %451 = vst [vmem:[%s273] sm:$0xff] %v443
        %452 = vst [vmem:[%s273 + $0x8] sm:$0xff] %v444
        %453 = vst [vmem:[%s273 + $0x10] sm:$0xff] %v445
        %454 = vst [vmem:[%s273 + $0x18] sm:$0xff] %v446
        %455 = vst [vmem:[%s273 + $0x20] sm:$0xff] %v447
        %456 = vst [vmem:[%s273 + $0x28] sm:$0xff] %v448
        %457 = vst [vmem:[%s273 + $0x30] sm:$0xff] %v449
        %458 = vst [vmem:[%s273 + $0x38] sm:$0xff] %v450
        %p459 = scmp.eq.s32.totalorder %s21, 1
        %p460 = pnand %p459, %p260
        %p461 = pneg %p460
        // Predicated region
        $region45: #{gnnrec_forward.1} parent=39 // pred_check
          _
        $region46: #{gnnrec_forward.1} parent=39 // pred_check_branch
          %463 = sbr.rel (%p460) target = $region48
        $region47: #{gnnrec_forward.1} parent=39 // pred_region
          %v464 = vld [vmem:[#allocation2] sm:$0xff]
          %v465 = vld [vmem:[#allocation2 + $0x8] sm:$0xff]
          %v466 = vld [vmem:[#allocation2 + $0x10] sm:$0xff]
          %v467 = vld [vmem:[#allocation2 + $0x18] sm:$0xff]
          %v468 = vld [vmem:[#allocation2 + $0x20] sm:$0xff]
          %v469 = vld [vmem:[#allocation2 + $0x28] sm:$0xff]
          %v470 = vld [vmem:[#allocation2 + $0x30] sm:$0xff]
          %v471 = vld [vmem:[#allocation2 + $0x38] sm:$0xff]
          %v472 = vld [vmem:[#allocation2 + $0x40] sm:$0xff]
          %v473 = vld [vmem:[#allocation2 + $0x48] sm:$0xff]
          %v474 = vld [vmem:[#allocation2 + $0x50] sm:$0xff]
          %v475 = vld [vmem:[#allocation2 + $0x58] sm:$0xff]
          %v476 = vld [vmem:[#allocation2 + $0x60] sm:$0xff]
          %v477 = vld [vmem:[#allocation2 + $0x68] sm:$0xff]
          %v478 = vld [vmem:[#allocation2 + $0x70] sm:$0xff]
          %v479 = vld [vmem:[#allocation2 + $0x78] sm:$0xff]
          %v480 = vld [vmem:[%s2] sm:$0x1]
          %v482 = vlaneseq
          %v483 = vshrl.u32 %v482, 7
          %v484 = vsub.s32 0, %v483
          %v485 = vrot.slane %v480, %v484
          %v487 = vadd.f32 %v464, %v485
          %v488 = vadd.f32 %v465, %v485
          %v489 = vadd.f32 %v466, %v485
          %v490 = vadd.f32 %v467, %v485
          %v491 = vadd.f32 %v468, %v485
          %v492 = vadd.f32 %v469, %v485
          %v493 = vadd.f32 %v470, %v485
          %v494 = vadd.f32 %v471, %v485
          %v495 = vadd.f32 %v472, %v485
          %v496 = vadd.f32 %v473, %v485
          %v497 = vadd.f32 %v474, %v485
          %v498 = vadd.f32 %v475, %v485
          %v499 = vadd.f32 %v476, %v485
          %v500 = vadd.f32 %v477, %v485
          %v501 = vadd.f32 %v478, %v485
          %v502 = vadd.f32 %v479, %v485
          %v503 = vmax.f32 %v487, 0.0
          %v504 = vmax.f32 %v488, 0.0
          %v505 = vmax.f32 %v489, 0.0
          %v506 = vmax.f32 %v490, 0.0
          %v507 = vmax.f32 %v491, 0.0
          %v508 = vmax.f32 %v492, 0.0
          %v509 = vmax.f32 %v493, 0.0
          %v510 = vmax.f32 %v494, 0.0
          %v511 = vmax.f32 %v495, 0.0
          %v512 = vmax.f32 %v496, 0.0
          %v513 = vmax.f32 %v497, 0.0
          %v514 = vmax.f32 %v498, 0.0
          %v515 = vmax.f32 %v499, 0.0
          %v516 = vmax.f32 %v500, 0.0
          %v517 = vmax.f32 %v501, 0.0
          %v518 = vmax.f32 %v502, 0.0
          %v519 = vlaneseq
          %v520 = vand.u32 %v519, 127
          %v521 = vld [vmem:[%s3] sm:$0xff]
          %v522 = vld [vmem:[%s3 + $0x8] sm:$0xff]
          %v523 = vld [vmem:[%s3 + $0x10] sm:$0xff]
          %v524 = vld [vmem:[%s3 + $0x18] sm:$0xff]
          %v525 = vld [vmem:[%s3 + $0x20] sm:$0xff]
          %v526 = vld [vmem:[%s3 + $0x28] sm:$0xff]
          %v527 = vld [vmem:[%s3 + $0x30] sm:$0xff]
          %v528 = vld [vmem:[%s3 + $0x38] sm:$0xff]
          %v529 = vld [vmem:[%s3 + $0x40] sm:$0xff]
          %v530 = vld [vmem:[%s3 + $0x48] sm:$0xff]
          %531 = vset.pattern.permute.xlu0 0
          %532 = vperm.xlu0 %531, %v521
          %v533 = vpop.permute.xlu0 %532
          %534 = vset.pattern.permute.xlu0 0
          %535 = vperm.xlu0 %534, %v522
          %v536 = vpop.permute.xlu0 %535
          %537 = vset.pattern.permute.xlu0 0
          %538 = vperm.xlu0 %537, %v523
          %v539 = vpop.permute.xlu0 %538
          %540 = vset.pattern.permute.xlu0 0
          %541 = vperm.xlu0 %540, %v524
          %v542 = vpop.permute.xlu0 %541
          %543 = vset.pattern.permute.xlu0 0
          %544 = vperm.xlu0 %543, %v525
          %v545 = vpop.permute.xlu0 %544
          %546 = vset.pattern.permute.xlu0 0
          %547 = vperm.xlu0 %546, %v526
          %v548 = vpop.permute.xlu0 %547
          %549 = vset.pattern.permute.xlu0 0
          %550 = vperm.xlu0 %549, %v527
          %v551 = vpop.permute.xlu0 %550
          %552 = vset.pattern.permute.xlu0 0
          %553 = vperm.xlu0 %552, %v528
          %v554 = vpop.permute.xlu0 %553
          %555 = vset.pattern.permute.xlu0 0
          %556 = vperm.xlu0 %555, %v529
          %v557 = vpop.permute.xlu0 %556
          %558 = vset.pattern.permute.xlu0 0
          %559 = vperm.xlu0 %558, %v530
          %v560 = vpop.permute.xlu0 %559
          %vm561 = vcmp.eq.s32.totalorder %v533, %v520
          %vm562 = vcmp.eq.s32.totalorder %v536, %v520
          %vm563 = vcmp.eq.s32.totalorder %v539, %v520
          %vm564 = vcmp.eq.s32.totalorder %v542, %v520
          %vm565 = vcmp.eq.s32.totalorder %v545, %v520
          %vm566 = vcmp.eq.s32.totalorder %v548, %v520
          %vm567 = vcmp.eq.s32.totalorder %v551, %v520
          %vm568 = vcmp.eq.s32.totalorder %v554, %v520
          %vm569 = vcmp.eq.s32.totalorder %v557, %v520
          %vm570 = vcmp.eq.s32.totalorder %v560, %v520
          %v571 = vsel %vm561, 1, 0
          %v572 = vsel %vm562, 1, 0
          %v573 = vsel %vm563, 1, 0
          %v574 = vsel %vm564, 1, 0
          %v575 = vsel %vm565, 1, 0
          %v576 = vsel %vm566, 1, 0
          %v577 = vsel %vm567, 1, 0
          %v578 = vsel %vm568, 1, 0
          %v579 = vsel %vm569, 1, 0
          %v580 = vsel %vm570, 1, 0
          %v581 = vcvt.s32.f32 %v571
          %v582 = vcvt.s32.f32 %v572
          %v583 = vcvt.s32.f32 %v573
          %v584 = vcvt.s32.f32 %v574
          %v585 = vcvt.s32.f32 %v575
          %v586 = vcvt.s32.f32 %v576
          %v587 = vcvt.s32.f32 %v577
          %v588 = vcvt.s32.f32 %v578
          %v589 = vcvt.s32.f32 %v579
          %v590 = vcvt.s32.f32 %v580
          %v591 = vpack.c.bf16 %v582, %v581
          %v592 = vpack.c.bf16 %v584, %v583
          %v593 = vpack.c.bf16 %v586, %v585
          %v594 = vpack.c.bf16 %v588, %v587
          %v595 = vpack.c.bf16 %v590, %v589
          %v596 = vpack.c.bf16 %v504, %v503
          %v597 = vpack.c.bf16 %v506, %v505
          %v598 = vpack.c.bf16 %v508, %v507
          %v599 = vpack.c.bf16 %v510, %v509
          %v600 = vpack.c.bf16 %v512, %v511
          %v601 = vpack.c.bf16 %v514, %v513
          %v602 = vpack.c.bf16 %v516, %v515
          %v603 = vpack.c.bf16 %v518, %v517
          %604 = vmatprep.subr.bf16.mxu0 0
          %605 = vmatpush1.bf16.msra.mxu0 %v596
          %606 = vmatprep.subr.bf16.mxu0 0
          %607 = vmatpush1.bf16.msra.mxu0 %v597
          %608 = vmatprep.subr.bf16.mxu0 0
          %609 = vmatpush1.bf16.msra.mxu0 %v598
          %610 = vmatprep.subr.bf16.mxu0 0
          %611 = vmatpush1.bf16.msra.mxu0 %v599
          %612 = vmatprep.subr.bf16.mxu0 0
          %613 = vmatpush1.bf16.msra.mxu0 %v600
          %614 = vmatprep.subr.bf16.mxu0 0
          %615 = vmatpush1.bf16.msra.mxu0 %v601
          %616 = vmatprep.subr.bf16.mxu0 0
          %617 = vmatpush1.bf16.msra.mxu0 %v602
          %618 = vmatprep.subr.bf16.mxu0 0
          %619 = vmatpush1.bf16.msra.mxu0 %v603
          %620 = vmatprep.subr.bf16.mxu0 0
          %621 = vmatpush1.bf16.msra.mxu0 0
          %622 = vmatprep.subr.bf16.mxu0 0
          %623 = vmatpush1.bf16.msra.mxu0 0
          %624 = vmatprep.subr.bf16.mxu0 0
          %625 = vmatpush1.bf16.msra.mxu0 0
          %626 = vmatprep.subr.bf16.mxu0 0
          %627 = vmatpush1.bf16.msra.mxu0 0
          %628 = vmatprep.subr.bf16.mxu0 0
          %629 = vmatpush1.bf16.msra.mxu0 0
          %630 = vmatprep.subr.bf16.mxu0 0
          %631 = vmatpush1.bf16.msra.mxu0 0
          %632 = vmatprep.subr.bf16.mxu0 0
          %633 = vmatpush1.bf16.msra.mxu0 0
          %634 = vmatprep.subr.bf16.mxu0 0
          %635 = vmatpush1.bf16.msra.mxu0 0
          %636 = vmatprep.mubr.bf16.mxu0 0
          %637 = vmatmul.mubr.bf16.gmra.mrb[0].mxu0 %v591
          %v638 = vpop.f32.mrb[0].mxu0
          %v639 = vadd.f32 0.0, %v638
          %v640 = vpop.f32.mrb[0].mxu0
          %v641 = vpop.f32.mrb[0].mxu0
          %v642 = vadd.f32 0.0, %v641
          %v643 = vpop.f32.mrb[0].mxu0
          %644 = vmatprep.mubr.bf16.mxu0 0
          %645 = vmatmul.mubr.bf16.gmra.mrb[0].mxu0 %v592
          %v646 = vpop.f32.mrb[0].mxu0
          %v647 = vadd.f32 0.0, %v646
          %v648 = vpop.f32.mrb[0].mxu0
          %v649 = vpop.f32.mrb[0].mxu0
          %v650 = vadd.f32 0.0, %v649
          %v651 = vpop.f32.mrb[0].mxu0
          %652 = vmatprep.mubr.bf16.mxu0 0
          %653 = vmatmul.mubr.bf16.gmra.mrb[0].mxu0 %v593
          %v654 = vpop.f32.mrb[0].mxu0
          %v655 = vadd.f32 0.0, %v654
          %v656 = vpop.f32.mrb[0].mxu0
          %v657 = vpop.f32.mrb[0].mxu0
          %v658 = vadd.f32 0.0, %v657
          %v659 = vpop.f32.mrb[0].mxu0
          %660 = vmatprep.mubr.bf16.mxu0 0
          %661 = vmatmul.mubr.bf16.gmra.mrb[0].mxu0 %v594
          %v662 = vpop.f32.mrb[0].mxu0
          %v663 = vadd.f32 0.0, %v662
          %v664 = vpop.f32.mrb[0].mxu0
          %v665 = vpop.f32.mrb[0].mxu0
          %v666 = vadd.f32 0.0, %v665
          %v667 = vpop.f32.mrb[0].mxu0
          %668 = vmatprep.mubr.bf16.mxu0 0
          %669 = vmatmul.mubr.bf16.gmra.mrb[0].mxu0 %v595
          %v670 = vpop.f32.mrb[0].mxu0
          %v671 = vadd.f32 0.0, %v670
          %v672 = vpop.f32.mrb[0].mxu0
          %v673 = vpop.f32.mrb[0].mxu0
          %v674 = vadd.f32 0.0, %v673
          %v675 = vpop.f32.mrb[0].mxu0
          %676 = vdwg.mxu0
          %v677 = vmul.f32 %v639, %v658
          %v678 = vmul.f32 %v642, %v663
          %v679 = vmul.f32 %v647, %v666
          %v680 = vmul.f32 %v650, %v671
          %v681 = vmul.f32 %v655, %v674
          %682 = vadd.xlane.f32.xlu0 %v677
          %v683 = vpop.xlane.xlu0 %682
          %684 = vadd.xlane.f32.xlu0 %v678
          %v685 = vpop.xlane.xlu0 %684
          %686 = vadd.xlane.f32.xlu0 %v679
          %v687 = vpop.xlane.xlu0 %686
          %688 = vadd.xlane.f32.xlu0 %v680
          %v689 = vpop.xlane.xlu0 %688
          %690 = vadd.xlane.f32.xlu0 %v681
          %v691 = vpop.xlane.xlu0 %690
          %v692 = vlaneseq
          %v693 = vshrl.u32 %v692, 7
          %v694 = vadd.s32 %v693, 8
          %v695 = vadd.s32 %v693, 16
          %v696 = vadd.s32 %v693, 24
          %v697 = vadd.s32 %v693, 32
          %vm698 = vcmp.lt.s32.totalorder %v693, 8
          %vm699 = vcmp.lt.s32.totalorder %v694, 8
          %vm700 = vcmp.lt.s32.totalorder %v695, 8
          %vm701 = vcmp.lt.s32.totalorder %v696, 8
          %vm702 = vcmp.lt.s32.totalorder %v697, 8
          %v703 = vsub.f32 0.0, %v683
          %v704 = vsub.f32 0.0, %v685
          %v705 = vsub.f32 0.0, %v687
          %v706 = vsub.f32 0.0, %v689
          %v707 = vsub.f32 0.0, %v691
          %v708 = vsel %vm698, %v683, %v703
          %v709 = vsel %vm699, %v685, %v704
          %v710 = vsel %vm700, %v687, %v705
          %v711 = vsel %vm701, %v689, %v706
          %v712 = vsel %vm702, %v691, %v707
          %v713 = vmin.f32 %v708, 0.0
          %v714 = vmin.f32 %v709, 0.0
          %v715 = vmin.f32 %v710, 0.0
          %v716 = vmin.f32 %v711, 0.0
          %v717 = vmin.f32 %v712, 0.0
          %v718 = vand.u32 2147483647, %v708
          %v719 = vand.u32 2147483647, %v709
          %v720 = vand.u32 2147483647, %v710
          %v721 = vand.u32 2147483647, %v711
          %v722 = vand.u32 2147483647, %v712
          %v723 = vsub.f32 0.0, %v718
          %v724 = vsub.f32 0.0, %v719
          %v725 = vsub.f32 0.0, %v720
          %v726 = vsub.f32 0.0, %v721
          %v727 = vsub.f32 0.0, %v722
          %v728 = vmul.f32 %v723, 1.442695
          %v729 = vpow.pop %v728
          %v730 = vmul.f32 %v724, 1.442695
          %v731 = vpow.pop %v730
          %v732 = vmul.f32 %v725, 1.442695
          %v733 = vpow.pop %v732
          %v734 = vmul.f32 %v726, 1.442695
          %v735 = vpow.pop %v734
          %v736 = vmul.f32 %v727, 1.442695
          %v737 = vpow.pop %v736
          %v738 = vadd.f32 %v729, 1.0
          %v739 = vlog2.pop %v738
          %v740 = vmul.f32 %v739, 0.6931472
          %v741 = vmul.f32 -0.5, %v729
          %v742 = vadd.f32 %v741, 1.0
          %v743 = vmul.f32 %v742, %v729
          %v744 = vand.u32 2147483647, %v729
          %vm745 = vcmp.lt.f32.partialorder %v744, 0.0004427343
          %v746 = vsel %vm745, %v743, %v740
          %v747 = vadd.f32 %v731, 1.0
          %v748 = vlog2.pop %v747
          %v749 = vmul.f32 %v748, 0.6931472
          %v750 = vmul.f32 -0.5, %v731
          %v751 = vadd.f32 %v750, 1.0
          %v752 = vmul.f32 %v751, %v731
          %v753 = vand.u32 2147483647, %v731
          %vm754 = vcmp.lt.f32.partialorder %v753, 0.0004427343
          %v755 = vsel %vm754, %v752, %v749
          %v756 = vadd.f32 %v733, 1.0
          %v757 = vlog2.pop %v756
          %v758 = vmul.f32 %v757, 0.6931472
          %v759 = vmul.f32 -0.5, %v733
          %v760 = vadd.f32 %v759, 1.0
          %v761 = vmul.f32 %v760, %v733
          %v762 = vand.u32 2147483647, %v733
          %vm763 = vcmp.lt.f32.partialorder %v762, 0.0004427343
          %v764 = vsel %vm763, %v761, %v758
          %v765 = vadd.f32 %v735, 1.0
          %v766 = vlog2.pop %v765
          %v767 = vmul.f32 %v766, 0.6931472
          %v768 = vmul.f32 -0.5, %v735
          %v769 = vadd.f32 %v768, 1.0
          %v770 = vmul.f32 %v769, %v735
          %v771 = vand.u32 2147483647, %v735
          %vm772 = vcmp.lt.f32.partialorder %v771, 0.0004427343
          %v773 = vsel %vm772, %v770, %v767
          %v774 = vadd.f32 %v737, 1.0
          %v775 = vlog2.pop %v774
          %v776 = vmul.f32 %v775, 0.6931472
          %v777 = vmul.f32 -0.5, %v737
          %v778 = vadd.f32 %v777, 1.0
          %v779 = vmul.f32 %v778, %v737
          %v780 = vand.u32 2147483647, %v737
          %vm781 = vcmp.lt.f32.partialorder %v780, 0.0004427343
          %v782 = vsel %vm781, %v779, %v776
          %v783 = vsub.f32 %v713, %v746
          %v784 = vsub.f32 %v714, %v755
          %v785 = vsub.f32 %v715, %v764
          %v786 = vsub.f32 %v716, %v773
          %v787 = vsub.f32 %v717, %v782
          %v788 = vld [vmem:[%s4] sm:$0xff]
          %v789 = vld [vmem:[%s4 + $0x8] sm:$0xff]
          %v790 = vld [vmem:[%s4 + $0x10] sm:$0xff]
          %v791 = vld [vmem:[%s4 + $0x18] sm:$0xff]
          %v792 = vld [vmem:[%s4 + $0x20] sm:$0xff]
          %v793 = vsub.f32 0.0, %v783
          %v794 = vsub.f32 0.0, %v784
          %v795 = vsub.f32 0.0, %v785
          %v796 = vsub.f32 0.0, %v786
          %v797 = vsub.f32 0.0, %v787
          %v798 = vmul.f32 %v788, %v793
          %v799 = vmul.f32 %v789, %v794
          %v800 = vmul.f32 %v790, %v795
          %v801 = vmul.f32 %v791, %v796
          %v802 = vmul.f32 %v792, %v797
          %vm803 = vcmask 7168
          %v804 = vsel %vm803, %v798, 0.0
          %v805 = vsel %vm803, %v799, 0.0
          %v806 = vadd.f32 %v804, %v805
          %v807 = vsel %vm803, %v800, 0.0
          %v808 = vadd.f32 %v806, %v807
          %v809 = vsel %vm803, %v801, 0.0
          %v810 = vadd.f32 %v808, %v809
          %v811 = vsel %vm803, %v802, 0.0
          %v812 = vadd.f32 %v810, %v811
          %813 = vadd.xlane.f32.xlu0 %v812
          %v814 = vpop.xlane.xlu0 %813
          %v815 = vrot.slane %v814, 4
          %v816 = vadd.f32 %v814, %v815
          %v817 = vrot.slane %v816, 2
          %v818 = vadd.f32 %v816, %v817
          %v819 = vrot.slane %v818, 1
          %v820 = vadd.f32 %v818, %v819
          %s821 = vtos %v820
          %s822 = scalar_lea.smem [#allocation3], 0
          %823 = sst [smem:[%s822]] %s821
        $region48: #{gnnrec_forward.1} parent=39 // pred_fallthru
          _
        // Predicated region
        $region49: #{gnnrec_forward.1} parent=39 // pred_check
          %p824 = pneg %p159
        $region50: #{gnnrec_forward.1} parent=39 // pred_check_branch
          %826 = sbr.rel (%p824) target = $region52
        $region51: #{gnnrec_forward.1} parent=39 // pred_region
          %s828 = ssub.s32 16, 16
          %829 = vsyncadd [#allocation4], %s828
          %832 = dma.smem_to_hbm [#allocation3], 16, %s5, [#allocation4]
        $region52: #{gnnrec_forward.1} parent=39 // pred_fallthru
          _
        // Predicated region
        $region53: #{gnnrec_forward.1} parent=39 // pred_check
          %p833 = pneg %p159
        $region54: #{gnnrec_forward.1} parent=39 // pred_check_branch
          %835 = sbr.rel (%p833) target = $region56
        $region55: #{gnnrec_forward.1} parent=39 // pred_region
          %836 = dma.done [#allocation4], 16
        $region56: #{gnnrec_forward.1} parent=39 // pred_fallthru
          _
        %837 = sfence
      $region40: #{gnnrec_forward.1} parent=5 // pred_fallthru
        _
      %p838 = scmp.le.s32.totalorder 2, %s12
      // Predicated region
      $region57: #{gnnrec_forward.1} parent=5 // pred_check
        %p839 = pneg %p838
      $region58: #{gnnrec_forward.1} parent=5 // pred_check_branch
        %841 = sbr.rel (%p839) target = $region60
      $region59: #{gnnrec_forward.1} parent=5 // pred_region
        %s842 = ssub.s32 %s12, 2
      $region60: #{gnnrec_forward.1} parent=5 // pred_fallthru
        _
    $region6: #{gnnrec_forward.1} parent=1 // loop_footer
      %s16 = sadd.s32 1, %s12
    $region7: #{gnnrec_forward.1} parent=1 // loop_footer_branch
      %11 = sbr.rel target = $region3
    $region8: #{gnnrec_forward.1} parent=1 // loop_exit
      _
    %843 = vsyncpa [#allocation4], 1
    %s844 = scalar_lea.sflag [#allocation4], 1
    %845 = vsyncpa %s844, 1

</llo_original>
